<compile_context>
chip_gen: v7x
topology: tpu7x:2x2x1
jax: 0.10.0
libtpu: 0.0.40
codegen_flags: <defaults>
</compile_context>

<pallas_src>
import jax
import jax.numpy as jnp
from jax.experimental import pallas as pl
from jax.experimental.pallas import tpu as pltpu


def _softplus(x):
    # numerically-stable softplus, elementwise on the VPU/EUP
    return jnp.maximum(x, 0.0) + jnp.log1p(jnp.exp(-jnp.abs(x)))


def _round_up(x, m):
    return ((x + m - 1) // m) * m


def _vmem_limit(tile_bytes):
    # actual double-buffered footprint + margin, clamped to a range that is
    # safe on v5e/v6e (128 MiB VMEM) as well as v7x (64 MiB physical).
    return int(min(max(tile_bytes + (8 << 20), 16 << 20), 40 << 20))


# ----------------------------------------------------------------------------
# Kernels
# ----------------------------------------------------------------------------

def _make_fused_kernel(tk, k_rem):
    """Reparameterize the weight tile and accumulate X @ W into o_ref."""

    def kernel(x_ref, wmu_ref, wrho_ref, epsw_ref, b_ref, o_ref):
        k = pl.program_id(2)
        nk = pl.num_programs(2)

        @pl.when(k == 0)
        def _init():
            o_ref[...] = jnp.zeros_like(o_ref)

        xv = x_ref[...]
        w = wmu_ref[...] + _softplus(wrho_ref[...]) * epsw_ref[...]

        if k_rem:  # K edge not tile-aligned: zero the overreach (garbage) region
            valid = jnp.where(k == nk - 1, k_rem, tk)
            row_ids = jax.lax.broadcasted_iota(jnp.int32, (tk, 1), 0)
            w = jnp.where(row_ids < valid, w, 0.0)
            col_ids = jax.lax.broadcasted_iota(jnp.int32, (1, tk), 1)
            xv = jnp.where(col_ids < valid, xv, 0.0)

        # bf16 MXU feeds, f32 accumulation directly in the VMEM-resident output.
        o_ref[...] += jnp.dot(xv.astype(jnp.bfloat16), w.astype(jnp.bfloat16),
                              preferred_element_type=jnp.float32)

        @pl.when(k == nk - 1)
        def _finalize():
            o_ref[...] += b_ref[...]

    return kernel


def _make_matmul_kernel(tk, k_rem):
    """Tiled matmul + bias with a pre-materialized bf16 W."""

    def kernel(x_ref, w_ref, b_ref, o_ref):
        k = pl.program_id(2)
        nk = pl.num_programs(2)

        @pl.when(k == 0)
        def _init():
            o_ref[...] = jnp.zeros_like(o_ref)

        xv = x_ref[...]
        w = w_ref[...]

        if k_rem:
            valid = jnp.where(k == nk - 1, k_rem, tk)
            col_ids = jax.lax.broadcasted_iota(jnp.int32, (1, tk), 1)
            xv = jnp.where(col_ids < valid, xv, 0.0)
            row_ids = jax.lax.broadcasted_iota(jnp.int32, (tk, 1), 0)
            w = jnp.where(row_ids < valid, w, jnp.zeros_like(w))

        o_ref[...] += jnp.dot(xv.astype(jnp.bfloat16), w,
                              preferred_element_type=jnp.float32)

        @pl.when(k == nk - 1)
        def _finalize():
            o_ref[...] += b_ref[...]

    return kernel


def _reparam_w_kernel(wmu_ref, wrho_ref, epsw_ref, w_ref):
    """Elementwise W = W_mu + softplus(W_rho) * eps_W, stored in bf16."""
    w = wmu_ref[...] + _softplus(wrho_ref[...]) * epsw_ref[...]
    w_ref[...] = w.astype(w_ref.dtype)


def _materialize_w(wmu, wrho, epsw, *, tk=512, tn=1024):
    """One streaming HBM pass producing W in bf16 (halves downstream reads)."""
    K, N = wmu.shape
    tk = min(tk, _round_up(K, 16))
    tn = min(tn, _round_up(N, 128))
    spec = pl.BlockSpec((tk, tn), lambda k, j: (k, j))
    # 3 f32 inputs + 1 bf16 output, all double-buffered.
    tile_bytes = 3 * 2 * tk * tn * 4 + 2 * tk * tn * 2
    return pl.pallas_call(
        _reparam_w_kernel,
        out_shape=jax.ShapeDtypeStruct((K, N), jnp.bfloat16),
        grid=(pl.cdiv(K, tk), pl.cdiv(N, tn)),
        in_specs=[spec, spec, spec],
        out_specs=spec,
        compiler_params=pltpu.CompilerParams(
            dimension_semantics=("parallel", "parallel"),
            vmem_limit_bytes=_vmem_limit(tile_bytes),
        ),
    )(wmu, wrho, epsw)


# ----------------------------------------------------------------------------
# Wrapper
# ----------------------------------------------------------------------------

def mlp_bbp_layer(x, w_mu, w_rho, eps_w, b_mu, b_rho, eps_b,
                  *, tm=512, tn=1024, tk=1024):
    """Pallas implementation of MLPBBPLayer.forward.

    x:     (batch, n_input) f32
    w_mu, w_rho, eps_w: (n_input, n_output) f32
    b_mu, b_rho, eps_b: (n_output,) f32
    returns (batch, n_output) f32  (bf16 MXU feeds, f32 accumulation)
    """
    batch, n_input = x.shape
    n_output = w_mu.shape[1]
    f32 = jnp.float32

    # Bias reparameterization is O(n_output): do it once in plain JAX so the
    # kernels carry a single (1, N) f32 bias row, added only on the last K step.
    bias = (b_mu.astype(f32)
            + jax.nn.softplus(b_rho.astype(f32)) * eps_b.astype(f32)
            ).reshape(1, n_output)

    m_al = _round_up(batch, 8)
    k_al = _round_up(n_input, 128)
    n_al = _round_up(n_output, 128)

    tm = min(tm, m_al)
    tk = min(tk, k_al)
    tn = min(tn, n_al)

    m_tiles = pl.cdiv(batch, tm)
    # HBM crossover: fused reads 3*K*N*(M/tm) f32 vs materialize 3*K*N f32
    # (read) + K*N bf16 (write) + K*N bf16 * (M/tm) (re-read), plus an extra
    # kernel launch -> fused still wins up to two M tiles.
    fused = m_tiles <= 2

    if fused:
        # Three f32 weight streams live in VMEM: cap tk so the double-buffered
        # footprint stays well under v7x's 64 MiB.
        tk = min(tk, 512)
        # v7x has 2 TensorCores sharded over the "parallel" axes: with a single
        # M tile, expose at least 2 N blocks so both cores get work.
        if m_tiles == 1 and pl.cdiv(n_al, tn) < 2 and n_al >= 256:
            tn = _round_up(pl.cdiv(n_al, 2), 128)

    grid = (m_tiles, pl.cdiv(n_output, tn), pl.cdiv(n_input, tk))
    k_rem = n_input % tk  # 0 -> K edge is tile-aligned, no in-kernel mask needed

    x = x.astype(f32)
    x_spec = pl.BlockSpec((tm, tk), lambda i, j, k: (i, k))
    w_spec = pl.BlockSpec((tk, tn), lambda i, j, k: (k, j))
    b_spec = pl.BlockSpec((1, tn), lambda i, j, k: (0, j))
    o_spec = pl.BlockSpec((tm, tn), lambda i, j, k: (i, j))
    sem = ("parallel", "parallel", "arbitrary")

    if fused:
        # Small batch: keep the weight reparameterization fused into the matmul
        # K loop (each weight tile is read from HBM at most twice, no W write).
        tile_bytes = (2 * tm * tk * 4          # x (f32, double-buffered)
                      + 3 * 2 * tk * tn * 4    # w_mu / w_rho / eps_w (f32)
                      + 2 * tn * 4             # bias row
                      + 2 * tm * tn * 4)       # output (f32)
        out = pl.pallas_call(
            _make_fused_kernel(tk, k_rem),
            out_shape=jax.ShapeDtypeStruct((batch, n_output), f32),
            grid=grid,
            in_specs=[x_spec, w_spec, w_spec, w_spec, b_spec],
            out_specs=o_spec,
            compiler_params=pltpu.CompilerParams(
                dimension_semantics=sem,
                vmem_limit_bytes=_vmem_limit(tile_bytes),
            ),
        )(x, w_mu.astype(f32), w_rho.astype(f32), eps_w.astype(f32), bias)
    else:
        # Many batch tiles: materialize W once in bf16, then a standard tiled
        # matmul (avoids 3x f32 weight traffic + repeated softplus per i-tile).
        w = _materialize_w(w_mu.astype(f32), w_rho.astype(f32),
                           eps_w.astype(f32))
        tile_bytes = (2 * tm * tk * 4          # x (f32)
                      + 2 * tk * tn * 2        # W (bf16)
                      + 2 * tn * 4             # bias row
                      + 2 * tm * tn * 4)       # output (f32)
        out = pl.pallas_call(
            _make_matmul_kernel(tk, k_rem),
            out_shape=jax.ShapeDtypeStruct((batch, n_output), f32),
            grid=grid,
            in_specs=[x_spec, w_spec, b_spec],
            out_specs=o_spec,
            compiler_params=pltpu.CompilerParams(
                dimension_semantics=sem,
                vmem_limit_bytes=_vmem_limit(tile_bytes),
            ),
        )(x, w, bias)

    return out


# ----------------------------------------------------------------------------
# Self-test
# ----------------------------------------------------------------------------

if __name__ == "__main__":
    init_variance = -1.0
    key = jax.random.PRNGKey(0)

    def make_case(k, batch, n_input, n_output):
        k_x, k_wmu, k_bmu, k_ew, k_eb = jax.random.split(k, 5)
        x = jax.random.normal(k_x, (batch, n_input), dtype=jnp.float32)
        w_mu = 0.1 * jax.random.normal(k_wmu, (n_input, n_output),
                                       dtype=jnp.float32)
        w_rho = jnp.full((n_input, n_output), init_variance, dtype=jnp.float32)
        b_mu = 0.1 * jax.random.normal(k_bmu, (n_output,), dtype=jnp.float32)
        b_rho = jnp.full((n_output,), init_variance, dtype=jnp.float32)
        # the forward()'s random epsilon draws, made deterministic inputs here
        eps_w = jax.random.normal(k_ew, (n_input, n_output), dtype=jnp.float32)
        eps_b = jax.random.normal(k_eb, (n_output,), dtype=jnp.float32)
        return x, w_mu, w_rho, eps_w, b_mu, b_rho, eps_b

    def ref_f32(x, w_mu, w_rho, eps_w, b_mu, b_rho, eps_b):
        w = w_mu + jax.nn.softplus(w_rho) * eps_w
        b = b_mu + jax.nn.softplus(b_rho) * eps_b
        return x @ w + b

    def ref_bf16(x, w_mu, w_rho, eps_w, b_mu, b_rho, eps_b):
        # same math as the kernel: bf16 MXU feeds, f32 accumulation
        w = w_mu + jax.nn.softplus(w_rho) * eps_w
        b = b_mu + jax.nn.softplus(b_rho) * eps_b
        out = jnp.dot(x.astype(jnp.bfloat16), w.astype(jnp.bfloat16),
                      preferred_element_type=jnp.float32)
        return out + b

    def check(out, args):
        rb = ref_bf16(*args)
        rf = ref_f32(*args)
        assert out.shape == rf.shape and out.dtype == jnp.float32
        # tight check against the bf16-feed / f32-accumulate reference
        assert jnp.allclose(out, rb, atol=3e-2, rtol=3e-2), \
            float(jnp.max(jnp.abs(out - rb)))
        # loose sanity check against the full-f32 reference (bf16 rounding)
        assert jnp.allclose(out, rf, atol=0.5, rtol=0.1), \
            float(jnp.max(jnp.abs(out - rf)))

    k1, k2, k3 = jax.random.split(key, 3)

    # Case 1: tiny unaligned layer -> fused path, single-block grid, K-edge mask.
    args1 = make_case(k1, batch=8, n_input=32, n_output=16)
    out1 = jax.block_until_ready(mlp_bbp_layer(*args1))
    check(out1, args1)

    # Case 2: multiple M tiles with unaligned K/N -> materialize-W (bf16) path,
    # K-axis output accumulation, in-kernel K-edge mask, partial output blocks.
    args2 = make_case(k2, batch=24, n_input=160, n_output=200)
    out2 = jax.block_until_ready(mlp_bbp_layer(*args2, tm=8, tn=128, tk=128))
    check(out2, args2)

    # Case 3: aligned shapes -> fused path, no K mask, and the 2-way N split
    # so both v7x TensorCores receive a parallel block.
    args3 = make_case(k3, batch=16, n_input=256, n_output=512)
    out3 = jax.block_until_ready(mlp_bbp_layer(*args3))
    check(out3, args3)

    print("KERNEL_OK")
</pallas_src>

<mosaic_0001>
module attributes {stable_mosaic.version = 11 : i64} {
  func.func @kernel(%arg0: i32, %arg1: i32, %arg2: i32, %arg3: memref<8x128xf32, #tpu.memory_space<vmem>>, %arg4: memref<128x128xf32, #tpu.memory_space<vmem>>, %arg5: memref<128x128xf32, #tpu.memory_space<vmem>>, %arg6: memref<128x128xf32, #tpu.memory_space<vmem>>, %arg7: memref<1x128xf32, #tpu.memory_space<vmem>>, %arg8: memref<8x128xf32, #tpu.memory_space<vmem>>) attributes {dimension_semantics = [#tpu.dimension_semantics<parallel>, #tpu.dimension_semantics<parallel>, #tpu.dimension_semantics<arbitrary>], iteration_bounds = array<i64: 1, 1, 1>, scalar_prefetch = 0 : i64, scratch_operands = 0 : i64, tpu.core_type = #tpu.core_type<tc>, window_params = [{transform_indices = @transform_0, window_bounds = array<i64: 8, 128>}, {transform_indices = @transform_1, window_bounds = array<i64: 128, 128>}, {transform_indices = @transform_2, window_bounds = array<i64: 128, 128>}, {transform_indices = @transform_3, window_bounds = array<i64: 128, 128>}, {transform_indices = @transform_4, window_bounds = array<i64: 1, 128>}, {transform_indices = @transform_5, window_bounds = array<i64: 8, 128>}]} {
    %c0_i32 = arith.constant 0 : i32
    %0 = arith.cmpi eq, %arg2, %c0_i32 : i32
    %1 = arith.extui %0 : i1 to i32
    %c0_i32_0 = arith.constant 0 : i32
    %2 = arith.cmpi ne, %1, %c0_i32_0 : i32
    scf.if %2 {
      %cst_19 = arith.constant 0.000000e+00 : f32
      %42 = vector.broadcast %cst_19 : f32 to vector<8x128xf32>
      %c0_20 = arith.constant 0 : index
      %c0_21 = arith.constant 0 : index
      %43 = vector.load %arg8[%c0_20, %c0_21] : memref<8x128xf32, #tpu.memory_space<vmem>>, vector<8x128xf32>
      tpu.vector_store %arg8[%c0_20, %c0_21], %42 {strides = array<i32>} : memref<8x128xf32, #tpu.memory_space<vmem>>, vector<8x128xf32>,
    } else {
    }
    %c0 = arith.constant 0 : index
    %c0_1 = arith.constant 0 : index
    %3 = vector.load %arg3[%c0, %c0_1] : memref<8x128xf32, #tpu.memory_space<vmem>>, vector<8x128xf32>
    %c0_2 = arith.constant 0 : index
    %c0_3 = arith.constant 0 : index
    %4 = vector.load %arg4[%c0_2, %c0_3] : memref<128x128xf32, #tpu.memory_space<vmem>>, vector<128x128xf32>
    %c0_4 = arith.constant 0 : index
    %c0_5 = arith.constant 0 : index
    %5 = vector.load %arg5[%c0_4, %c0_5] : memref<128x128xf32, #tpu.memory_space<vmem>>, vector<128x128xf32>
    %cst = arith.constant 0.000000e+00 : f32
    %6 = vector.broadcast %cst : f32 to vector<128x128xf32>
    %7 = arith.maximumf %5, %6 : vector<128x128xf32>
    %8 = math.absf %5 : vector<128x128xf32>
    %cst_6 = arith.constant 0.000000e+00 : f32
    %9 = vector.broadcast %cst_6 : f32 to vector<128x128xf32>
    %10 = arith.subf %9, %8 : vector<128x128xf32>
    %11 = math.exp %10 : vector<128x128xf32>
    %12 = math.log1p %11 : vector<128x128xf32>
    %13 = arith.addf %7, %12 : vector<128x128xf32>
    %c0_7 = arith.constant 0 : index
    %c0_8 = arith.constant 0 : index
    %14 = vector.load %arg6[%c0_7, %c0_8] : memref<128x128xf32, #tpu.memory_space<vmem>>, vector<128x128xf32>
    %15 = arith.mulf %13, %14 : vector<128x128xf32>
    %16 = arith.addf %4, %15 : vector<128x128xf32>
    %c0_i32_9 = arith.constant 0 : i32
    %17 = arith.cmpi eq, %arg2, %c0_i32_9 : i32
    %c32_i32 = arith.constant 32 : i32
    %c128_i32 = arith.constant 128 : i32
    %18 = arith.select %17, %c32_i32, %c128_i32 : i32
    %19 = tpu.iota {dimensions = array<i32: 0>} : vector<128x1xi32>
    %20 = vector.broadcast %18 : i32 to vector<128x1xi32>
    %21 = arith.cmpi slt, %19, %20 : vector<128x1xi32>
    %cst_10 = arith.constant 0.000000e+00 : f32
    %22 = vector.shape_cast %21 : vector<128x1xi1> to vector<128x1xi1>
    %23 = vector.broadcast %22 : vector<128x1xi1> to vector<128x128xi1>
    %24 = vector.broadcast %cst_10 : f32 to vector<128x128xf32>
    %25 = arith.select %23, %16, %24 : vector<128x128xi1>, vector<128x128xf32>
    %26 = tpu.iota {dimensions = array<i32: 1>} : vector<1x128xi32>
    %27 = vector.broadcast %18 : i32 to vector<1x128xi32>
    %28 = arith.cmpi slt, %26, %27 : vector<1x128xi32>
    %cst_11 = arith.constant 0.000000e+00 : f32
    %29 = vector.shape_cast %28 : vector<1x128xi1> to vector<1x128xi1>
    %30 = vector.broadcast %29 : vector<1x128xi1> to vector<8x128xi1>
    %31 = vector.broadcast %cst_11 : f32 to vector<8x128xf32>
    %32 = arith.select %30, %3, %31 : vector<8x128xi1>, vector<8x128xf32>
    %c0_12 = arith.constant 0 : index
    %c0_13 = arith.constant 0 : index
    %33 = vector.load %arg8[%c0_12, %c0_13] : memref<8x128xf32, #tpu.memory_space<vmem>>, vector<8x128xf32>
    %34 = arith.truncf %32 : vector<8x128xf32> to vector<8x128xbf16>
    %35 = arith.truncf %25 : vector<128x128xf32> to vector<128x128xbf16>
    %cst_14 = arith.constant dense<0.000000e+00> : vector<8x128xf32>
    %36 = tpu.matmul %34, %35, %cst_14 {dimension_numbers = #tpu.dot_dimension_numbers<[1], [0], [0], [1], [0, 0, 1, 1], [], []>} : vector<8x128xbf16>, vector<128x128xbf16>, vector<8x128xf32> -> vector<8x128xf32>
    %37 = arith.addf %33, %36 : vector<8x128xf32>
    %c0_15 = arith.constant 0 : index
    %c0_16 = arith.constant 0 : index
    %38 = vector.load %arg8[%c0_15, %c0_16] : memref<8x128xf32, #tpu.memory_space<vmem>>, vector<8x128xf32>
    tpu.vector_store %arg8[%c0_15, %c0_16], %37 {strides = array<i32>} : memref<8x128xf32, #tpu.memory_space<vmem>>, vector<8x128xf32>,
    %c0_i32_17 = arith.constant 0 : i32
    %39 = arith.cmpi eq, %arg2, %c0_i32_17 : i32
    %40 = arith.extui %39 : i1 to i32
    %c0_i32_18 = arith.constant 0 : i32
    %41 = arith.cmpi ne, %40, %c0_i32_18 : i32
    scf.if %41 {
      %c0_19 = arith.constant 0 : index
      %c0_20 = arith.constant 0 : index
      %42 = vector.load %arg8[%c0_19, %c0_20] : memref<8x128xf32, #tpu.memory_space<vmem>>, vector<8x128xf32>
      %c0_21 = arith.constant 0 : index
      %c0_22 = arith.constant 0 : index
      %43 = vector.load %arg7[%c0_21, %c0_22] : memref<1x128xf32, #tpu.memory_space<vmem>>, vector<1x128xf32>
      %44 = vector.broadcast %43 : vector<1x128xf32> to vector<8x128xf32>
      %45 = arith.addf %42, %44 : vector<8x128xf32>
      %c0_23 = arith.constant 0 : index
      %c0_24 = arith.constant 0 : index
      %46 = vector.load %arg8[%c0_23, %c0_24] : memref<8x128xf32, #tpu.memory_space<vmem>>, vector<8x128xf32>
      tpu.vector_store %arg8[%c0_23, %c0_24], %45 {strides = array<i32>} : memref<8x128xf32, #tpu.memory_space<vmem>>, vector<8x128xf32>,
    } else {
    }
    return
  }
  func.func @transform_0(%arg0: i32, %arg1: i32, %arg2: i32) -> (i32, i32) {
    %c0_i32 = arith.constant 0 : i32
    return %arg0, %arg2 : i32, i32
  }
  func.func @transform_1(%arg0: i32, %arg1: i32, %arg2: i32) -> (i32, i32) {
    %c0_i32 = arith.constant 0 : i32
    return %arg2, %arg1 : i32, i32
  }
  func.func @transform_2(%arg0: i32, %arg1: i32, %arg2: i32) -> (i32, i32) {
    %c0_i32 = arith.constant 0 : i32
    return %arg2, %arg1 : i32, i32
  }
  func.func @transform_3(%arg0: i32, %arg1: i32, %arg2: i32) -> (i32, i32) {
    %c0_i32 = arith.constant 0 : i32
    return %arg2, %arg1 : i32, i32
  }
  func.func @transform_4(%arg0: i32, %arg1: i32, %arg2: i32) -> (i32, i32) {
    %c0_i32 = arith.constant 0 : i32
    %c0_i32_0 = arith.constant 0 : i32
    return %c0_i32, %arg1 : i32, i32
  }
  func.func @transform_5(%arg0: i32, %arg1: i32, %arg2: i32) -> (i32, i32) {
    %c0_i32 = arith.constant 0 : i32
    return %arg0, %arg1 : i32, i32
  }
}

</mosaic_0001>

<llo_original>
// kernel: tpu_custom_call.1
$region0: #{tpu_custom_call.1}
  #allocation0 [shape = 'u32[]', space=smem, size = 0x4, offset = 0x4, fixed_abs, tag = 'smem constant byte address 0x4 - core index']
  #allocation1 [shape = 'u32[144,128]{1,0:T(1,128)}', space=vmem, size = 0x12000, scoped, tag = 'internal scratch']
  %s0 = inlined_call_operand.vmem [shape: f32[8,32], index: 0, kind: input, shape index: {}]
  %s1 = inlined_call_operand.vmem [shape: f32[32,16], index: 1, kind: input, shape index: {}]
  %s2 = inlined_call_operand.vmem [shape: f32[32,16], index: 2, kind: input, shape index: {}]
  %s3 = inlined_call_operand.vmem [shape: f32[32,16], index: 3, kind: input, shape index: {}]
  %s4 = inlined_call_operand.vmem [shape: f32[1,16], index: 4, kind: input, shape index: {}]
  %s5 = inlined_call_operand.hbm [shape: f32[8,16], index: 5, kind: output, shape index: {}]
  %s6 = sld [smem:[#allocation0]]
  $region38: #{tpu_custom_call.1} parent=0
    _
  %s8 = ssub.s32 1, %s6
  %s9 = scalar_select 0, %s8, %s6
  $region1: #{tpu_custom_call.1} parent=0
    #allocation2 [shape = 'u8[4096]{0}', space=vmem, size = 0x1000, scoped, tag = 'output window, operand 0, single buffered']
    #allocation3 [shape = 's32[1]{0}', space=sflag, size = 0x4, scoped, tag = 'scoped memory for tpu_custom_call.1']
    %10 = vsyncpa [#allocation3], 0
    // Predicated region
    $region2: #{tpu_custom_call.1} parent=1 // pred_check
      _
    $region3: #{tpu_custom_call.1} parent=1 // pred_check_branch
      %12 = sbr.rel (0) target = $region5
    $region4: #{tpu_custom_call.1} parent=1 // pred_region
      _
    $region5: #{tpu_custom_call.1} parent=1 // pred_fallthru
      _
    // Predicated region
    $region6: #{tpu_custom_call.1} parent=1 // pred_check
      _
    $region7: #{tpu_custom_call.1} parent=1 // pred_check_branch
      %14 = sbr.rel (0) target = $region9
    $region8: #{tpu_custom_call.1} parent=1 // pred_region
      _
    $region9: #{tpu_custom_call.1} parent=1 // pred_fallthru
      _
    // Predicated region
    $region10: #{tpu_custom_call.1} parent=1 // pred_check
      _
    $region11: #{tpu_custom_call.1} parent=1 // pred_check_branch
      %16 = sbr.rel (0) target = $region13
    $region12: #{tpu_custom_call.1} parent=1 // pred_region
      _
    $region13: #{tpu_custom_call.1} parent=1 // pred_fallthru
      _
    // Predicated region
    $region14: #{tpu_custom_call.1} parent=1 // pred_check
      _
    $region15: #{tpu_custom_call.1} parent=1 // pred_check_branch
      %18 = sbr.rel (0) target = $region17
    $region16: #{tpu_custom_call.1} parent=1 // pred_region
      _
    $region17: #{tpu_custom_call.1} parent=1 // pred_fallthru
      _
    // Predicated region
    $region18: #{tpu_custom_call.1} parent=1 // pred_check
      _
    $region19: #{tpu_custom_call.1} parent=1 // pred_check_branch
      %20 = sbr.rel (0) target = $region21
    $region20: #{tpu_custom_call.1} parent=1 // pred_region
      _
    $region21: #{tpu_custom_call.1} parent=1 // pred_fallthru
      _
    %p22 = scmp.eq.s32.totalorder 0, 0
    // Predicated region
    $region22: #{tpu_custom_call.1} parent=1 // pred_check
      %p23 = pneg %p22
    $region23: #{tpu_custom_call.1} parent=1 // pred_check_branch
      %25 = sbr.rel (%p23) target = $region25
    $region24: #{tpu_custom_call.1} parent=1 // pred_region
      %26 = vst [vmem:[#allocation2] sm:$0xff] 0.0
    $region25: #{tpu_custom_call.1} parent=1 // pred_fallthru
      _
    %v27 = vld [vmem:[%s0] sm:$0xff]
    %v28 = vld [vmem:[%s1] sm:$0xff]
    %v29 = vld [vmem:[%s1 + $0x8] sm:$0xff]
    %v30 = vld [vmem:[%s1 + $0x10] sm:$0xff]
    %v31 = vld [vmem:[%s1 + $0x18] sm:$0xff]
    %v32 = vld [vmem:[%s1 + $0x20] sm:$0xff]
    %v33 = vld [vmem:[%s1 + $0x28] sm:$0xff]
    %v34 = vld [vmem:[%s1 + $0x30] sm:$0xff]
    %v35 = vld [vmem:[%s1 + $0x38] sm:$0xff]
    %v36 = vld [vmem:[%s1 + $0x40] sm:$0xff]
    %v37 = vld [vmem:[%s1 + $0x48] sm:$0xff]
    %v38 = vld [vmem:[%s1 + $0x50] sm:$0xff]
    %v39 = vld [vmem:[%s1 + $0x58] sm:$0xff]
    %v40 = vld [vmem:[%s1 + $0x60] sm:$0xff]
    %v41 = vld [vmem:[%s1 + $0x68] sm:$0xff]
    %v42 = vld [vmem:[%s1 + $0x70] sm:$0xff]
    %v43 = vld [vmem:[%s1 + $0x78] sm:$0xff]
    %v44 = vld [vmem:[%s2] sm:$0xff]
    %v45 = vld [vmem:[%s2 + $0x8] sm:$0xff]
    %v46 = vld [vmem:[%s2 + $0x10] sm:$0xff]
    %v47 = vld [vmem:[%s2 + $0x18] sm:$0xff]
    %v48 = vld [vmem:[%s2 + $0x20] sm:$0xff]
    %v49 = vld [vmem:[%s2 + $0x28] sm:$0xff]
    %v50 = vld [vmem:[%s2 + $0x30] sm:$0xff]
    %v51 = vld [vmem:[%s2 + $0x38] sm:$0xff]
    %v52 = vld [vmem:[%s2 + $0x40] sm:$0xff]
    %v53 = vld [vmem:[%s2 + $0x48] sm:$0xff]
    %v54 = vld [vmem:[%s2 + $0x50] sm:$0xff]
    %v55 = vld [vmem:[%s2 + $0x58] sm:$0xff]
    %v56 = vld [vmem:[%s2 + $0x60] sm:$0xff]
    %v57 = vld [vmem:[%s2 + $0x68] sm:$0xff]
    %v58 = vld [vmem:[%s2 + $0x70] sm:$0xff]
    %v59 = vld [vmem:[%s2 + $0x78] sm:$0xff]
    %v60 = vmax.f32 %v44, 0.0
    %v61 = vmax.f32 %v45, 0.0
    %v62 = vmax.f32 %v46, 0.0
    %v63 = vmax.f32 %v47, 0.0
    %v64 = vmax.f32 %v48, 0.0
    %v65 = vmax.f32 %v49, 0.0
    %v66 = vmax.f32 %v50, 0.0
    %v67 = vmax.f32 %v51, 0.0
    %v68 = vmax.f32 %v52, 0.0
    %v69 = vmax.f32 %v53, 0.0
    %v70 = vmax.f32 %v54, 0.0
    %v71 = vmax.f32 %v55, 0.0
    %v72 = vmax.f32 %v56, 0.0
    %v73 = vmax.f32 %v57, 0.0
    %v74 = vmax.f32 %v58, 0.0
    %v75 = vmax.f32 %v59, 0.0
    %v76 = vand.u32 2147483647, %v44
    %v77 = vand.u32 2147483647, %v45
    %v78 = vand.u32 2147483647, %v46
    %v79 = vand.u32 2147483647, %v47
    %v80 = vand.u32 2147483647, %v48
    %v81 = vand.u32 2147483647, %v49
    %v82 = vand.u32 2147483647, %v50
    %v83 = vand.u32 2147483647, %v51
    %v84 = vand.u32 2147483647, %v52
    %v85 = vand.u32 2147483647, %v53
    %v86 = vand.u32 2147483647, %v54
    %v87 = vand.u32 2147483647, %v55
    %v88 = vand.u32 2147483647, %v56
    %v89 = vand.u32 2147483647, %v57
    %v90 = vand.u32 2147483647, %v58
    %v91 = vand.u32 2147483647, %v59
    %v92 = vsub.f32 0.0, %v76
    %v93 = vsub.f32 0.0, %v77
    %v94 = vsub.f32 0.0, %v78
    %v95 = vsub.f32 0.0, %v79
    %v96 = vsub.f32 0.0, %v80
    %v97 = vsub.f32 0.0, %v81
    %v98 = vsub.f32 0.0, %v82
    %v99 = vsub.f32 0.0, %v83
    %v100 = vsub.f32 0.0, %v84
    %v101 = vsub.f32 0.0, %v85
    %v102 = vsub.f32 0.0, %v86
    %v103 = vsub.f32 0.0, %v87
    %v104 = vsub.f32 0.0, %v88
    %v105 = vsub.f32 0.0, %v89
    %v106 = vsub.f32 0.0, %v90
    %v107 = vsub.f32 0.0, %v91
    %v108 = vmul.f32 %v92, 1.442695
    %v109 = vpow.pop %v108
    %v110 = vmul.f32 %v93, 1.442695
    %v111 = vpow.pop %v110
    %v112 = vmul.f32 %v94, 1.442695
    %v113 = vpow.pop %v112
    %v114 = vmul.f32 %v95, 1.442695
    %v115 = vpow.pop %v114
    %v116 = vmul.f32 %v96, 1.442695
    %v117 = vpow.pop %v116
    %v118 = vmul.f32 %v97, 1.442695
    %v119 = vpow.pop %v118
    %v120 = vmul.f32 %v98, 1.442695
    %v121 = vpow.pop %v120
    %v122 = vmul.f32 %v99, 1.442695
    %v123 = vpow.pop %v122
    %v124 = vmul.f32 %v100, 1.442695
    %v125 = vpow.pop %v124
    %v126 = vmul.f32 %v101, 1.442695
    %v127 = vpow.pop %v126
    %v128 = vmul.f32 %v102, 1.442695
    %v129 = vpow.pop %v128
    %v130 = vmul.f32 %v103, 1.442695
    %v131 = vpow.pop %v130
    %v132 = vmul.f32 %v104, 1.442695
    %v133 = vpow.pop %v132
    %v134 = vmul.f32 %v105, 1.442695
    %v135 = vpow.pop %v134
    %v136 = vmul.f32 %v106, 1.442695
    %v137 = vpow.pop %v136
    %v138 = vmul.f32 %v107, 1.442695
    %v139 = vpow.pop %v138
    %v140 = vadd.f32 %v109, 1.0
    %v141 = vlog2.pop %v140
    %v142 = vmul.f32 %v141, 0.6931472
    %v143 = vmul.f32 -0.5, %v109
    %v144 = vadd.f32 %v143, 1.0
    %v145 = vmul.f32 %v144, %v109
    %v146 = vand.u32 2147483647, %v109
    %vm147 = vcmp.lt.f32.partialorder %v146, 0.0004427343
    %v148 = vsel %vm147, %v145, %v142
    %v149 = vadd.f32 %v111, 1.0
    %v150 = vlog2.pop %v149
    %v151 = vmul.f32 %v150, 0.6931472
    %v152 = vmul.f32 -0.5, %v111
    %v153 = vadd.f32 %v152, 1.0
    %v154 = vmul.f32 %v153, %v111
    %v155 = vand.u32 2147483647, %v111
    %vm156 = vcmp.lt.f32.partialorder %v155, 0.0004427343
    %v157 = vsel %vm156, %v154, %v151
    %v158 = vadd.f32 %v113, 1.0
    %v159 = vlog2.pop %v158
    %v160 = vmul.f32 %v159, 0.6931472
    %v161 = vmul.f32 -0.5, %v113
    %v162 = vadd.f32 %v161, 1.0
    %v163 = vmul.f32 %v162, %v113
    %v164 = vand.u32 2147483647, %v113
    %vm165 = vcmp.lt.f32.partialorder %v164, 0.0004427343
    %v166 = vsel %vm165, %v163, %v160
    %v167 = vadd.f32 %v115, 1.0
    %v168 = vlog2.pop %v167
    %v169 = vmul.f32 %v168, 0.6931472
    %v170 = vmul.f32 -0.5, %v115
    %v171 = vadd.f32 %v170, 1.0
    %v172 = vmul.f32 %v171, %v115
    %v173 = vand.u32 2147483647, %v115
    %vm174 = vcmp.lt.f32.partialorder %v173, 0.0004427343
    %v175 = vsel %vm174, %v172, %v169
    %v176 = vadd.f32 %v117, 1.0
    %v177 = vlog2.pop %v176
    %v178 = vmul.f32 %v177, 0.6931472
    %v179 = vmul.f32 -0.5, %v117
    %v180 = vadd.f32 %v179, 1.0
    %v181 = vmul.f32 %v180, %v117
    %v182 = vand.u32 2147483647, %v117
    %vm183 = vcmp.lt.f32.partialorder %v182, 0.0004427343
    %v184 = vsel %vm183, %v181, %v178
    %v185 = vadd.f32 %v119, 1.0
    %v186 = vlog2.pop %v185
    %v187 = vmul.f32 %v186, 0.6931472
    %v188 = vmul.f32 -0.5, %v119
    %v189 = vadd.f32 %v188, 1.0
    %v190 = vmul.f32 %v189, %v119
    %v191 = vand.u32 2147483647, %v119
    %vm192 = vcmp.lt.f32.partialorder %v191, 0.0004427343
    %v193 = vsel %vm192, %v190, %v187
    %v194 = vadd.f32 %v121, 1.0
    %v195 = vlog2.pop %v194
    %v196 = vmul.f32 %v195, 0.6931472
    %v197 = vmul.f32 -0.5, %v121
    %v198 = vadd.f32 %v197, 1.0
    %v199 = vmul.f32 %v198, %v121
    %v200 = vand.u32 2147483647, %v121
    %vm201 = vcmp.lt.f32.partialorder %v200, 0.0004427343
    %v202 = vsel %vm201, %v199, %v196
    %v203 = vadd.f32 %v123, 1.0
    %v204 = vlog2.pop %v203
    %v205 = vmul.f32 %v204, 0.6931472
    %v206 = vmul.f32 -0.5, %v123
    %v207 = vadd.f32 %v206, 1.0
    %v208 = vmul.f32 %v207, %v123
    %v209 = vand.u32 2147483647, %v123
    %vm210 = vcmp.lt.f32.partialorder %v209, 0.0004427343
    %v211 = vsel %vm210, %v208, %v205
    %v212 = vadd.f32 %v125, 1.0
    %v213 = vlog2.pop %v212
    %v214 = vmul.f32 %v213, 0.6931472
    %v215 = vmul.f32 -0.5, %v125
    %v216 = vadd.f32 %v215, 1.0
    %v217 = vmul.f32 %v216, %v125
    %v218 = vand.u32 2147483647, %v125
    %vm219 = vcmp.lt.f32.partialorder %v218, 0.0004427343
    %v220 = vsel %vm219, %v217, %v214
    %v221 = vadd.f32 %v127, 1.0
    %v222 = vlog2.pop %v221
    %v223 = vmul.f32 %v222, 0.6931472
    %v224 = vmul.f32 -0.5, %v127
    %v225 = vadd.f32 %v224, 1.0
    %v226 = vmul.f32 %v225, %v127
    %v227 = vand.u32 2147483647, %v127
    %vm228 = vcmp.lt.f32.partialorder %v227, 0.0004427343
    %v229 = vsel %vm228, %v226, %v223
    %v230 = vadd.f32 %v129, 1.0
    %v231 = vlog2.pop %v230
    %v232 = vmul.f32 %v231, 0.6931472
    %v233 = vmul.f32 -0.5, %v129
    %v234 = vadd.f32 %v233, 1.0
    %v235 = vmul.f32 %v234, %v129
    %v236 = vand.u32 2147483647, %v129
    %vm237 = vcmp.lt.f32.partialorder %v236, 0.0004427343
    %v238 = vsel %vm237, %v235, %v232
    %v239 = vadd.f32 %v131, 1.0
    %v240 = vlog2.pop %v239
    %v241 = vmul.f32 %v240, 0.6931472
    %v242 = vmul.f32 -0.5, %v131
    %v243 = vadd.f32 %v242, 1.0
    %v244 = vmul.f32 %v243, %v131
    %v245 = vand.u32 2147483647, %v131
    %vm246 = vcmp.lt.f32.partialorder %v245, 0.0004427343
    %v247 = vsel %vm246, %v244, %v241
    %v248 = vadd.f32 %v133, 1.0
    %v249 = vlog2.pop %v248
    %v250 = vmul.f32 %v249, 0.6931472
    %v251 = vmul.f32 -0.5, %v133
    %v252 = vadd.f32 %v251, 1.0
    %v253 = vmul.f32 %v252, %v133
    %v254 = vand.u32 2147483647, %v133
    %vm255 = vcmp.lt.f32.partialorder %v254, 0.0004427343
    %v256 = vsel %vm255, %v253, %v250
    %v257 = vadd.f32 %v135, 1.0
    %v258 = vlog2.pop %v257
    %v259 = vmul.f32 %v258, 0.6931472
    %v260 = vmul.f32 -0.5, %v135
    %v261 = vadd.f32 %v260, 1.0
    %v262 = vmul.f32 %v261, %v135
    %v263 = vand.u32 2147483647, %v135
    %vm264 = vcmp.lt.f32.partialorder %v263, 0.0004427343
    %v265 = vsel %vm264, %v262, %v259
    %v266 = vadd.f32 %v137, 1.0
    %v267 = vlog2.pop %v266
    %v268 = vmul.f32 %v267, 0.6931472
    %v269 = vmul.f32 -0.5, %v137
    %v270 = vadd.f32 %v269, 1.0
    %v271 = vmul.f32 %v270, %v137
    %v272 = vand.u32 2147483647, %v137
    %vm273 = vcmp.lt.f32.partialorder %v272, 0.0004427343
    %v274 = vsel %vm273, %v271, %v268
    %v275 = vadd.f32 %v139, 1.0
    %v276 = vlog2.pop %v275
    %v277 = vmul.f32 %v276, 0.6931472
    %v278 = vmul.f32 -0.5, %v139
    %v279 = vadd.f32 %v278, 1.0
    %v280 = vmul.f32 %v279, %v139
    %v281 = vand.u32 2147483647, %v139
    %vm282 = vcmp.lt.f32.partialorder %v281, 0.0004427343
    %v283 = vsel %vm282, %v280, %v277
    %v284 = vadd.f32 %v60, %v148
    %v285 = vadd.f32 %v61, %v157
    %v286 = vadd.f32 %v62, %v166
    %v287 = vadd.f32 %v63, %v175
    %v288 = vadd.f32 %v64, %v184
    %v289 = vadd.f32 %v65, %v193
    %v290 = vadd.f32 %v66, %v202
    %v291 = vadd.f32 %v67, %v211
    %v292 = vadd.f32 %v68, %v220
    %v293 = vadd.f32 %v69, %v229
    %v294 = vadd.f32 %v70, %v238
    %v295 = vadd.f32 %v71, %v247
    %v296 = vadd.f32 %v72, %v256
    %v297 = vadd.f32 %v73, %v265
    %v298 = vadd.f32 %v74, %v274
    %v299 = vadd.f32 %v75, %v283
    %v300 = vld [vmem:[%s3] sm:$0xff]
    %v301 = vld [vmem:[%s3 + $0x8] sm:$0xff]
    %v302 = vld [vmem:[%s3 + $0x10] sm:$0xff]
    %v303 = vld [vmem:[%s3 + $0x18] sm:$0xff]
    %v304 = vld [vmem:[%s3 + $0x20] sm:$0xff]
    %v305 = vld [vmem:[%s3 + $0x28] sm:$0xff]
    %v306 = vld [vmem:[%s3 + $0x30] sm:$0xff]
    %v307 = vld [vmem:[%s3 + $0x38] sm:$0xff]
    %v308 = vld [vmem:[%s3 + $0x40] sm:$0xff]
    %v309 = vld [vmem:[%s3 + $0x48] sm:$0xff]
    %v310 = vld [vmem:[%s3 + $0x50] sm:$0xff]
    %v311 = vld [vmem:[%s3 + $0x58] sm:$0xff]
    %v312 = vld [vmem:[%s3 + $0x60] sm:$0xff]
    %v313 = vld [vmem:[%s3 + $0x68] sm:$0xff]
    %v314 = vld [vmem:[%s3 + $0x70] sm:$0xff]
    %v315 = vld [vmem:[%s3 + $0x78] sm:$0xff]
    %v316 = vmul.f32 %v284, %v300
    %v317 = vmul.f32 %v285, %v301
    %v318 = vmul.f32 %v286, %v302
    %v319 = vmul.f32 %v287, %v303
    %v320 = vmul.f32 %v288, %v304
    %v321 = vmul.f32 %v289, %v305
    %v322 = vmul.f32 %v290, %v306
    %v323 = vmul.f32 %v291, %v307
    %v324 = vmul.f32 %v292, %v308
    %v325 = vmul.f32 %v293, %v309
    %v326 = vmul.f32 %v294, %v310
    %v327 = vmul.f32 %v295, %v311
    %v328 = vmul.f32 %v296, %v312
    %v329 = vmul.f32 %v297, %v313
    %v330 = vmul.f32 %v298, %v314
    %v331 = vmul.f32 %v299, %v315
    %v332 = vadd.f32 %v28, %v316
    %v333 = vadd.f32 %v29, %v317
    %v334 = vadd.f32 %v30, %v318
    %v335 = vadd.f32 %v31, %v319
    %v336 = vadd.f32 %v32, %v320
    %v337 = vadd.f32 %v33, %v321
    %v338 = vadd.f32 %v34, %v322
    %v339 = vadd.f32 %v35, %v323
    %v340 = vadd.f32 %v36, %v324
    %v341 = vadd.f32 %v37, %v325
    %v342 = vadd.f32 %v38, %v326
    %v343 = vadd.f32 %v39, %v327
    %v344 = vadd.f32 %v40, %v328
    %v345 = vadd.f32 %v41, %v329
    %v346 = vadd.f32 %v42, %v330
    %v347 = vadd.f32 %v43, %v331
    %s348 = scalar_select %p22, 32, 128
    %v349 = vlaneseq
    %v350 = vshrl.u32 %v349, 7
    %v351 = vadd.s32 %v350, 8
    %v352 = vadd.s32 %v350, 16
    %v353 = vadd.s32 %v350, 24
    %v354 = vadd.s32 %v350, 32
    %v355 = vadd.s32 %v350, 40
    %v356 = vadd.s32 %v350, 48
    %v357 = vadd.s32 %v350, 56
    %v358 = vadd.s32 %v350, 64
    %v359 = vadd.s32 %v350, 72
    %v360 = vadd.s32 %v350, 80
    %v361 = vadd.s32 %v350, 88
    %v362 = vadd.s32 %v350, 96
    %v363 = vadd.s32 %v350, 104
    %v364 = vadd.s32 %v350, 112
    %v365 = vadd.s32 %v350, 120
    %v366 = vstv %s348
    %vm367 = vcmp.lt.s32.totalorder %v350, %v366
    %vm368 = vcmp.lt.s32.totalorder %v351, %v366
    %vm369 = vcmp.lt.s32.totalorder %v352, %v366
    %vm370 = vcmp.lt.s32.totalorder %v353, %v366
    %vm371 = vcmp.lt.s32.totalorder %v354, %v366
    %vm372 = vcmp.lt.s32.totalorder %v355, %v366
    %vm373 = vcmp.lt.s32.totalorder %v356, %v366
    %vm374 = vcmp.lt.s32.totalorder %v357, %v366
    %vm375 = vcmp.lt.s32.totalorder %v358, %v366
    %vm376 = vcmp.lt.s32.totalorder %v359, %v366
    %vm377 = vcmp.lt.s32.totalorder %v360, %v366
    %vm378 = vcmp.lt.s32.totalorder %v361, %v366
    %vm379 = vcmp.lt.s32.totalorder %v362, %v366
    %vm380 = vcmp.lt.s32.totalorder %v363, %v366
    %vm381 = vcmp.lt.s32.totalorder %v364, %v366
    %vm382 = vcmp.lt.s32.totalorder %v365, %v366
    %v383 = vsel %vm367, 1, 0
    %v384 = vsel %vm368, 1, 0
    %v385 = vsel %vm369, 1, 0
    %v386 = vsel %vm370, 1, 0
    %v387 = vsel %vm371, 1, 0
    %v388 = vsel %vm372, 1, 0
    %v389 = vsel %vm373, 1, 0
    %v390 = vsel %vm374, 1, 0
    %v391 = vsel %vm375, 1, 0
    %v392 = vsel %vm376, 1, 0
    %v393 = vsel %vm377, 1, 0
    %v394 = vsel %vm378, 1, 0
    %v395 = vsel %vm379, 1, 0
    %v396 = vsel %vm380, 1, 0
    %v397 = vsel %vm381, 1, 0
    %v398 = vsel %vm382, 1, 0
    %vm399 = vcmp.eq.s32.totalorder %v383, 1
    %vm400 = vcmp.eq.s32.totalorder %v384, 1
    %vm401 = vcmp.eq.s32.totalorder %v385, 1
    %vm402 = vcmp.eq.s32.totalorder %v386, 1
    %vm403 = vcmp.eq.s32.totalorder %v387, 1
    %vm404 = vcmp.eq.s32.totalorder %v388, 1
    %vm405 = vcmp.eq.s32.totalorder %v389, 1
    %vm406 = vcmp.eq.s32.totalorder %v390, 1
    %vm407 = vcmp.eq.s32.totalorder %v391, 1
    %vm408 = vcmp.eq.s32.totalorder %v392, 1
    %vm409 = vcmp.eq.s32.totalorder %v393, 1
    %vm410 = vcmp.eq.s32.totalorder %v394, 1
    %vm411 = vcmp.eq.s32.totalorder %v395, 1
    %vm412 = vcmp.eq.s32.totalorder %v396, 1
    %vm413 = vcmp.eq.s32.totalorder %v397, 1
    %vm414 = vcmp.eq.s32.totalorder %v398, 1
    %v415 = vsel %vm399, %v332, 0.0
    %v416 = vsel %vm400, %v333, 0.0
    %v417 = vsel %vm401, %v334, 0.0
    %v418 = vsel %vm402, %v335, 0.0
    %v419 = vsel %vm403, %v336, 0.0
    %v420 = vsel %vm404, %v337, 0.0
    %v421 = vsel %vm405, %v338, 0.0
    %v422 = vsel %vm406, %v339, 0.0
    %v423 = vsel %vm407, %v340, 0.0
    %v424 = vsel %vm408, %v341, 0.0
    %v425 = vsel %vm409, %v342, 0.0
    %v426 = vsel %vm410, %v343, 0.0
    %v427 = vsel %vm411, %v344, 0.0
    %v428 = vsel %vm412, %v345, 0.0
    %v429 = vsel %vm413, %v346, 0.0
    %v430 = vsel %vm414, %v347, 0.0
    %v431 = vlaneseq
    %v432 = vand.u32 %v431, 127
    %vm433 = vcmp.lt.s32.totalorder %v432, %v366
    %v434 = vsel %vm433, 1, 0
    %vm435 = vcmp.eq.s32.totalorder %v434, 1
    %v436 = vsel %vm435, %v27, 0.0
    %v437 = vld [vmem:[#allocation2] sm:$0xff]
    %v438 = vpack.c.bf16 %v436, %v436
    %v439 = vpack.c.bf16 %v416, %v415
    %v440 = vpack.c.bf16 %v418, %v417
    %v441 = vpack.c.bf16 %v420, %v419
    %v442 = vpack.c.bf16 %v422, %v421
    %v443 = vpack.c.bf16 %v424, %v423
    %v444 = vpack.c.bf16 %v426, %v425
    %v445 = vpack.c.bf16 %v428, %v427
    %v446 = vpack.c.bf16 %v430, %v429
    %447 = vmatprep.subr.bf16.mxu0 0
    %448 = vmatpush1.bf16.msra.mxu0 %v439
    %449 = vmatprep.subr.bf16.mxu0 0
    %450 = vmatpush1.bf16.msra.mxu0 %v440
    %451 = vmatprep.subr.bf16.mxu0 0
    %452 = vmatpush1.bf16.msra.mxu0 %v441
    %453 = vmatprep.subr.bf16.mxu0 0
    %454 = vmatpush1.bf16.msra.mxu0 %v442
    %455 = vmatprep.subr.bf16.mxu0 0
    %456 = vmatpush1.bf16.msra.mxu0 %v443
    %457 = vmatprep.subr.bf16.mxu0 0
    %458 = vmatpush1.bf16.msra.mxu0 %v444
    %459 = vmatprep.subr.bf16.mxu0 0
    %460 = vmatpush1.bf16.msra.mxu0 %v445
    %461 = vmatprep.subr.bf16.mxu0 0
    %462 = vmatpush1.bf16.msra.mxu0 %v446
    %463 = vmatprep.subr.bf16.mxu0 0
    %464 = vmatpush1.bf16.msra.mxu0 0
    %465 = vmatprep.subr.bf16.mxu0 0
    %466 = vmatpush1.bf16.msra.mxu0 0
    %467 = vmatprep.subr.bf16.mxu0 0
    %468 = vmatpush1.bf16.msra.mxu0 0
    %469 = vmatprep.subr.bf16.mxu0 0
    %470 = vmatpush1.bf16.msra.mxu0 0
    %471 = vmatprep.subr.bf16.mxu0 0
    %472 = vmatpush1.bf16.msra.mxu0 0
    %473 = vmatprep.subr.bf16.mxu0 0
    %474 = vmatpush1.bf16.msra.mxu0 0
    %475 = vmatprep.subr.bf16.mxu0 0
    %476 = vmatpush1.bf16.msra.mxu0 0
    %477 = vmatprep.subr.bf16.mxu0 0
    %478 = vmatpush1.bf16.msra.mxu0 0
    %479 = vmatprep.mubr.bf16.mxu0 0
    %480 = vmatmul.mubr.bf16.gmra.mrb[0].mxu0 %v438
    %v481 = vpop.f32.mrb[0].mxu0
    %v482 = vadd.f32 0.0, %v481
    %v483 = vpop.f32.mrb[0].mxu0
    %v484 = vpop.f32.mrb[0].mxu0
    %v485 = vpop.f32.mrb[0].mxu0
    %486 = vdwg.mxu0
    %v487 = vadd.f32 %v437, %v482
    %488 = vst [vmem:[#allocation2] sm:$0xff] %v487
    // Predicated region
    $region26: #{tpu_custom_call.1} parent=1 // pred_check
      %p489 = pneg %p22
    $region27: #{tpu_custom_call.1} parent=1 // pred_check_branch
      %491 = sbr.rel (%p489) target = $region29
    $region28: #{tpu_custom_call.1} parent=1 // pred_region
      %v492 = vld [vmem:[#allocation2] sm:$0xff]
      %v493 = vld [vmem:[%s4] sm:$0x1]
      %v495 = vlaneseq
      %v496 = vshrl.u32 %v495, 7
      %v497 = vsub.s32 0, %v496
      %v498 = vrot.slane %v493, %v497
      %v500 = vadd.f32 %v492, %v498
      %501 = vst [vmem:[#allocation2] sm:$0xff] %v500
    $region29: #{tpu_custom_call.1} parent=1 // pred_fallthru
      _
    // Predicated region
    $region30: #{tpu_custom_call.1} parent=1 // pred_check
      _
    $region31: #{tpu_custom_call.1} parent=1 // pred_check_branch
      %503 = sbr.rel (0) target = $region33
    $region32: #{tpu_custom_call.1} parent=1 // pred_region
      %s505 = ssub.s32 128, 128
      %506 = vsyncadd [#allocation3], %s505
      %s508 = sshll.u32 [#allocation2], 4
      %s509 = int_to_ptr.vmem [resolvable:$true] %s508
      %511 = dma.vmem_to_hbm [thread:$0]  %s509, 128, %s5, [#allocation3]
    $region33: #{tpu_custom_call.1} parent=1 // pred_fallthru
      _
    // Predicated region
    $region34: #{tpu_custom_call.1} parent=1 // pred_check
      _
    $region35: #{tpu_custom_call.1} parent=1 // pred_check_branch
      %513 = sbr.rel (0) target = $region37
    $region36: #{tpu_custom_call.1} parent=1 // pred_region
      %514 = dma.done [#allocation3], 128
    $region37: #{tpu_custom_call.1} parent=1 // pred_fallthru
      _
    %515 = vsyncpa [#allocation3], 1

</llo_original>
